<compile_context>
chip_gen: v7x
topology: tpu7x:2x2x1
jax: 0.10.0
libtpu: 0.0.40
codegen_flags: <defaults>
</compile_context>

<pallas_src>
import jax
import jax.numpy as jnp
from jax import lax
from jax.experimental import pallas as pl
from jax.experimental.pallas import tpu as pltpu


def _round_up(x, m):
    return ((x + m - 1) // m) * m


def _pick_row_tile(H, pitch, pool, max_lanes=4096):
    cands = [t for t in range(1, H + 1)
             if H % t == 0 and (not pool or t % 2 == 0)]
    fitting = [t for t in cands if t * pitch <= max_lanes]
    return max(fitting) if fitting else min(cands)


# ----------------------------------------------------------------------------
# Kernel
# ----------------------------------------------------------------------------
def _make_kernel(Cin, Cout, pitch, TR, L_comp, Lout_b, first_layer, pool):
    """One (batch, row-tile) step.

    x_ref  : (1, 1, Cin+1, Linb) bf16 — rows 0..Cin-1: reflect-padded x,
             row Cin: zero-padded mask; (TR+2) padded rows flattened on lanes.
    w_ref  : (Cout+1, 9*(Cin+1)) bf16 — fused conv + mask-count weights.
    out_ref: (1, 1, Cout, Lout_b) f32
    mout_ref:(1, 1, 1,    Lout_b) f32
    """
    Cin1 = Cin + 1
    taps = [(dy, dx) for dy in range(3) for dx in range(3)]

    def kernel(x_ref, w_ref, out_ref, mout_ref):
        blk = x_ref[0, 0]                        # (Cin+1, Linb) bf16
        m = blk[Cin:Cin1, :]                     # (1, Linb) 0/1 mask row
        xm = blk[:Cin, :] * m                    # partial conv masks the input (exact)
        if first_layer:
            xm = xm * m                          # EncodeBlock masks once more
        xin = jnp.concatenate([xm, m], axis=0)   # (Cin+1, Linb)

        # im2col-lite: 9 contiguous lane-shifted windows stacked on the K dim.
        lhs = jnp.concatenate(
            [xin[:, dy * pitch + dx: dy * pitch + dx + L_comp] for dy, dx in taps],
            axis=0)                              # (9*(Cin+1), L_comp) bf16

        # One MXU dot: rows 0..Cout-1 = conv(x*m), row Cout = window mask count.
        res = jnp.dot(w_ref[...], lhs, preferred_element_type=jnp.float32)
        conv = res[:Cout, :]                     # (Cout, L_comp) f32
        msum = res[Cout:Cout + 1, :]             # (1, L_comp)   f32 (exact counts)

        ratio = 9.0 * pl.reciprocal(msum + 1e-8, approx=True)
        upd = jnp.clip(msum, 0.0, 1.0)
        out1 = conv * (ratio * upd)                       # broadcast over Cout
        out2 = jnp.where(out1 >= 0.0, out1, 0.1 * out1)   # LeakyReLU(0.1)

        if pool:
            Lf = TR * pitch
            def pool4(a):
                # 2x2 window max via shifted full-res views (+1 col, +pitch row).
                return jnp.maximum(
                    jnp.maximum(a[:, 0:Lf], a[:, 1:1 + Lf]),
                    jnp.maximum(a[:, pitch:pitch + Lf],
                                a[:, pitch + 1:pitch + 1 + Lf]))
            pm, pu = pool4(out2), pool4(upd)
            # In-kernel row compaction: write only the pooled (even) rows.
            out_ref[0, 0] = jnp.concatenate(
                [pm[:, 2 * i * pitch: 2 * i * pitch + pitch] for i in range(TR // 2)],
                axis=1)
            mout_ref[0, 0] = jnp.concatenate(
                [pu[:, 2 * i * pitch: 2 * i * pitch + pitch] for i in range(TR // 2)],
                axis=1)
        else:
            out_ref[0, 0] = out2[:, :Lout_b]
            mout_ref[0, 0] = upd[:, :Lout_b]

    return kernel


# ----------------------------------------------------------------------------
# Wrapper (padding / halo tiling / weight fusion glue; everything stays NCHW)
# ----------------------------------------------------------------------------
def encode_block_pallas(x_nchw, mask_nchw, w_hwio, *, flag, first_layer, row_tile=None):
    N, Cin, H, W = x_nchw.shape
    Cout = w_hwio.shape[-1]
    pitch = W + 2                                # conv-input / conv-output row pitch
    if flag:
        assert H % 2 == 0 and W % 2 == 0, "MaxPool2d(2) needs even H, W"

    TR = row_tile if row_tile is not None else _pick_row_tile(H, pitch, flag)
    assert H % TR == 0 and (not flag or TR % 2 == 0), "invalid row tile"
    R = H // TR

    # Conv positions computed per tile (pool shifts need one extra row + 1 lane).
    L_comp = TR * pitch + (pitch + 1 if flag else 0)
    Linb = _round_up(max((TR + 2) * pitch, 2 * pitch + 2 + L_comp), 128)
    Lout_b = (TR // 2) * pitch if flag else TR * pitch

    # --- padding + halo row tiles (one wrapper pass, bf16) ---
    xp = jnp.pad(x_nchw.astype(jnp.float32),
                 ((0, 0), (0, 0), (1, 1), (1, 1)), mode="reflect")   # ReflectionPad2d(1)
    mp = jnp.pad(mask_nchw.astype(jnp.float32),
                 ((0, 0), (0, 0), (1, 1), (1, 1)))                   # ZeroPad2d(1)
    xin = jnp.concatenate([xp, mp], axis=1).astype(jnp.bfloat16)     # (N, Cin+1, H+2, pitch)
    tiles = jnp.stack(
        [xin[:, :, r * TR:r * TR + TR + 2, :].reshape(N, Cin + 1, (TR + 2) * pitch)
         for r in range(R)], axis=1)                                 # (N, R, Cin+1, (TR+2)*pitch)
    x_tiles = jnp.pad(tiles, ((0, 0), (0, 0), (0, 0), (0, Linb - (TR + 2) * pitch)))

    # Fused weight matrix: rows 0..Cout-1 = conv taps, row Cout = mask counter.
    w_oc = jnp.transpose(w_hwio.reshape(9, Cin, Cout), (2, 0, 1))    # (Cout, tap, Cin)
    w_big = jnp.zeros((Cout + 1, 9, Cin + 1), jnp.float32)
    w_big = w_big.at[:Cout, :, :Cin].set(w_oc)
    w_big = w_big.at[Cout, :, Cin].set(1.0)
    w2 = w_big.reshape(Cout + 1, 9 * (Cin + 1)).astype(jnp.bfloat16)

    kernel = _make_kernel(Cin, Cout, pitch, TR, L_comp, Lout_b, first_layer, flag)

    out_t, mo_t = pl.pallas_call(
        kernel,
        out_shape=(
            jax.ShapeDtypeStruct((N, R, Cout, Lout_b), jnp.float32),
            jax.ShapeDtypeStruct((N, R, 1, Lout_b), jnp.float32),
        ),
        grid=(N, R),
        in_specs=[
            pl.BlockSpec((1, 1, Cin + 1, Linb), lambda n, r: (n, r, 0, 0)),
            pl.BlockSpec((Cout + 1, 9 * (Cin + 1)), lambda n, r: (0, 0)),
        ],
        out_specs=(
            pl.BlockSpec((1, 1, Cout, Lout_b), lambda n, r: (n, r, 0, 0)),
            pl.BlockSpec((1, 1, 1, Lout_b), lambda n, r: (n, r, 0, 0)),
        ),
        compiler_params=pltpu.CompilerParams(
            dimension_semantics=("parallel", "parallel"),
            vmem_limit_bytes=32 * 1024 * 1024,
        ),
    )(x_tiles, w2)

    Hr = TR // 2 if flag else TR
    out_full = out_t.reshape(N, R, Cout, Hr, pitch).transpose(0, 2, 1, 3, 4)
    out_full = out_full.reshape(N, Cout, R * Hr, pitch)
    mo_full = mo_t.reshape(N, R, 1, Hr, pitch).transpose(0, 2, 1, 3, 4)
    mo_full = mo_full.reshape(N, 1, R * Hr, pitch)
    if flag:
        # pooled columns live at even col indices of the row-compacted map
        return out_full[:, :, :, 0:W:2], mo_full[:, :, :, 0:W:2]
    return out_full[:, :, :, :W], mo_full[:, :, :, :W]


# ----------------------------------------------------------------------------
# Pure-JAX reference (for correctness check)
# ----------------------------------------------------------------------------
def encode_block_reference(x, mask, w_hwio, flag, first_layer):
    dn = ("NCHW", "OIHW", "NCHW")
    xp = jnp.pad(x, ((0, 0), (0, 0), (1, 1), (1, 1)), mode="reflect")
    mp = jnp.pad(mask, ((0, 0), (0, 0), (1, 1), (1, 1)))
    if first_layer:
        xp = xp * mp
    w_oihw = jnp.transpose(w_hwio, (3, 2, 0, 1))
    upd = lax.conv_general_dilated(mp, jnp.ones((1, 1, 3, 3), jnp.float32),
                                   (1, 1), "VALID", dimension_numbers=dn)
    ratio = 9.0 / (upd + 1e-8)
    updc = jnp.clip(upd, 0.0, 1.0)
    ratio = ratio * updc
    raw = lax.conv_general_dilated(xp * mp, w_oihw, (1, 1), "VALID", dimension_numbers=dn)
    out1 = raw * ratio
    out2 = jnp.where(out1 >= 0.0, out1, 0.1 * out1)
    if flag:
        pool = lambda t: lax.reduce_window(t, -jnp.inf, lax.max,
                                           (1, 1, 2, 2), (1, 1, 2, 2), "VALID")
        return pool(out2), pool(updc)
    return out2, updc


# ----------------------------------------------------------------------------
if __name__ == "__main__":
    key = jax.random.PRNGKey(0)
    k1, k2, k3 = jax.random.split(key, 3)

    N, Cin, Cout, H, W = 2, 4, 8, 16, 16
    x = jax.random.normal(k1, (N, Cin, H, W), jnp.float32)
    mask = (jax.random.uniform(k2, (N, 1, H, W)) > 0.3).astype(jnp.float32)
    w_hwio = 0.1 * jax.random.normal(k3, (3, 3, Cin, Cout), jnp.float32)  # HWIO weights

    # Reference is fed bf16-quantized x / w so it matches the MXU operand
    # precision; remaining diffs are accumulation order + approx reciprocal.
    xq = x.astype(jnp.bfloat16).astype(jnp.float32)
    wq = w_hwio.astype(jnp.bfloat16).astype(jnp.float32)

    cases = [
        dict(flag=True, first_layer=True, row_tile=None),    # pooled, single row tile
        dict(flag=False, first_layer=False, row_tile=None),   # unpooled, single row tile
        dict(flag=True, first_layer=False, row_tile=4),       # pooled, 4 row tiles (halo path)
        dict(flag=False, first_layer=True, row_tile=8),       # unpooled, 2 row tiles
    ]
    for c in cases:
        out, mo = encode_block_pallas(x, mask, w_hwio, **c)
        out = jax.block_until_ready(out)
        mo = jax.block_until_ready(mo)

        ref_out, ref_mo = encode_block_reference(xq, mask, wq, c["flag"], c["first_layer"])
        assert out.shape == ref_out.shape and mo.shape == ref_mo.shape, \
            (out.shape, ref_out.shape, mo.shape, ref_mo.shape)
        assert jnp.allclose(out, ref_out, atol=2e-2, rtol=2e-2), \
            float(jnp.max(jnp.abs(out - ref_out)))
        assert jnp.allclose(mo, ref_mo, atol=1e-5), "mask_out mismatch"

    print("KERNEL_OK")
</pallas_src>

<mosaic_0001>
module attributes {stable_mosaic.version = 11 : i64} {
  func.func @kernel(%arg0: i32, %arg1: i32, %arg2: memref<1x1x5x384xbf16, #tpu.memory_space<vmem>>, %arg3: memref<9x45xbf16, #tpu.memory_space<vmem>>, %arg4: memref<1x1x8x144xf32, #tpu.memory_space<vmem>>, %arg5: memref<1x1x1x144xf32, #tpu.memory_space<vmem>>) attributes {dimension_semantics = [#tpu.dimension_semantics<parallel>, #tpu.dimension_semantics<parallel>], iteration_bounds = array<i64: 2, 1>, scalar_prefetch = 0 : i64, scratch_operands = 0 : i64, tpu.core_type = #tpu.core_type<tc>, window_params = [{transform_indices = @transform_0, window_bounds = array<i64: 1, 1, 5, 384>}, {pipeline_mode = #tpu.pipeline_mode<synchronous>, transform_indices = @transform_1, window_bounds = array<i64: 9, 45>}, {transform_indices = @transform_2, window_bounds = array<i64: 1, 1, 8, 144>}, {transform_indices = @transform_3, window_bounds = array<i64: 1, 1, 1, 144>}]} {
    %c0 = arith.constant 0 : index
    %c0_0 = arith.constant 0 : index
    %c0_1 = arith.constant 0 : index
    %c0_2 = arith.constant 0 : index
    %0 = vector.load %arg2[%c0, %c0_0, %c0_1, %c0_2] : memref<1x1x5x384xbf16, #tpu.memory_space<vmem>>, vector<1x1x5x384xbf16>
    %1 = vector.shape_cast %0 : vector<1x1x5x384xbf16> to vector<5x384xbf16>
    %2 = vector.extract_strided_slice %1 {offsets = [4, 0], sizes = [1, 384], strides = [1, 1]} : vector<5x384xbf16> to vector<1x384xbf16>
    %3 = vector.extract_strided_slice %1 {offsets = [0, 0], sizes = [4, 384], strides = [1, 1]} : vector<5x384xbf16> to vector<4x384xbf16>
    %4 = vector.broadcast %2 : vector<1x384xbf16> to vector<4x384xbf16>
    %5 = arith.mulf %3, %4 : vector<4x384xbf16>
    %6 = vector.broadcast %2 : vector<1x384xbf16> to vector<4x384xbf16>
    %7 = arith.mulf %5, %6 : vector<4x384xbf16>
    %8 = tpu.concatenate %7, %2 in 0 : vector<4x384xbf16>, vector<1x384xbf16> -> vector<5x384xbf16>
    %9 = vector.extract_strided_slice %8 {offsets = [0, 0], sizes = [5, 307], strides = [1, 1]} : vector<5x384xbf16> to vector<5x307xbf16>
    %10 = vector.extract_strided_slice %8 {offsets = [0, 1], sizes = [5, 307], strides = [1, 1]} : vector<5x384xbf16> to vector<5x307xbf16>
    %11 = vector.extract_strided_slice %8 {offsets = [0, 2], sizes = [5, 307], strides = [1, 1]} : vector<5x384xbf16> to vector<5x307xbf16>
    %12 = vector.extract_strided_slice %8 {offsets = [0, 18], sizes = [5, 307], strides = [1, 1]} : vector<5x384xbf16> to vector<5x307xbf16>
    %13 = vector.extract_strided_slice %8 {offsets = [0, 19], sizes = [5, 307], strides = [1, 1]} : vector<5x384xbf16> to vector<5x307xbf16>
    %14 = vector.extract_strided_slice %8 {offsets = [0, 20], sizes = [5, 307], strides = [1, 1]} : vector<5x384xbf16> to vector<5x307xbf16>
    %15 = vector.extract_strided_slice %8 {offsets = [0, 36], sizes = [5, 307], strides = [1, 1]} : vector<5x384xbf16> to vector<5x307xbf16>
    %16 = vector.extract_strided_slice %8 {offsets = [0, 37], sizes = [5, 307], strides = [1, 1]} : vector<5x384xbf16> to vector<5x307xbf16>
    %17 = vector.extract_strided_slice %8 {offsets = [0, 38], sizes = [5, 307], strides = [1, 1]} : vector<5x384xbf16> to vector<5x307xbf16>
    %18 = tpu.concatenate %9, %10, %11, %12, %13, %14, %15, %16, %17 in 0 : vector<5x307xbf16>, vector<5x307xbf16>, vector<5x307xbf16>, vector<5x307xbf16>, vector<5x307xbf16>, vector<5x307xbf16>, vector<5x307xbf16>, vector<5x307xbf16>, vector<5x307xbf16> -> vector<45x307xbf16>
    %c0_3 = arith.constant 0 : index
    %c0_4 = arith.constant 0 : index
    %19 = vector.load %arg3[%c0_3, %c0_4] : memref<9x45xbf16, #tpu.memory_space<vmem>>, vector<9x45xbf16>
    %cst = arith.constant dense<0.000000e+00> : vector<9x307xf32>
    %20 = tpu.matmul %19, %18, %cst {dimension_numbers = #tpu.dot_dimension_numbers<[1], [0], [0], [1], [0, 0, 1, 1], [], []>} : vector<9x45xbf16>, vector<45x307xbf16>, vector<9x307xf32> -> vector<9x307xf32>
    %21 = vector.extract_strided_slice %20 {offsets = [0, 0], sizes = [8, 307], strides = [1, 1]} : vector<9x307xf32> to vector<8x307xf32>
    %22 = vector.extract_strided_slice %20 {offsets = [8, 0], sizes = [1, 307], strides = [1, 1]} : vector<9x307xf32> to vector<1x307xf32>
    %cst_5 = arith.constant 9.99999993E-9 : f32
    %23 = vector.broadcast %cst_5 : f32 to vector<1x307xf32>
    %24 = arith.addf %22, %23 : vector<1x307xf32>
    %25 = tpu.reciprocal %24 {approx = true} : vector<1x307xf32> -> vector<1x307xf32>
    %cst_6 = arith.constant 9.000000e+00 : f32
    %26 = vector.broadcast %cst_6 : f32 to vector<1x307xf32>
    %27 = arith.mulf %26, %25 : vector<1x307xf32>
    %cst_7 = arith.constant 0.000000e+00 : f32
    %cst_8 = arith.constant 1.000000e+00 : f32
    %28 = vector.broadcast %cst_7 : f32 to vector<1x307xf32>
    %29 = arith.maximumf %28, %22 : vector<1x307xf32>
    %30 = vector.broadcast %cst_8 : f32 to vector<1x307xf32>
    %31 = arith.minimumf %30, %29 : vector<1x307xf32>
    %32 = arith.mulf %27, %31 : vector<1x307xf32>
    %33 = vector.broadcast %32 : vector<1x307xf32> to vector<8x307xf32>
    %34 = arith.mulf %21, %33 : vector<8x307xf32>
    %cst_9 = arith.constant 0.000000e+00 : f32
    %35 = vector.broadcast %cst_9 : f32 to vector<8x307xf32>
    %36 = arith.cmpf oge, %34, %35 : vector<8x307xf32>
    %cst_10 = arith.constant 1.000000e-01 : f32
    %37 = vector.broadcast %cst_10 : f32 to vector<8x307xf32>
    %38 = arith.mulf %37, %34 : vector<8x307xf32>
    %39 = arith.select %36, %34, %38 : vector<8x307xi1>, vector<8x307xf32>
    %40 = vector.extract_strided_slice %39 {offsets = [0, 0], sizes = [8, 288], strides = [1, 1]} : vector<8x307xf32> to vector<8x288xf32>
    %41 = vector.extract_strided_slice %39 {offsets = [0, 1], sizes = [8, 288], strides = [1, 1]} : vector<8x307xf32> to vector<8x288xf32>
    %42 = arith.maximumf %40, %41 : vector<8x288xf32>
    %43 = vector.extract_strided_slice %39 {offsets = [0, 18], sizes = [8, 288], strides = [1, 1]} : vector<8x307xf32> to vector<8x288xf32>
    %44 = vector.extract_strided_slice %39 {offsets = [0, 19], sizes = [8, 288], strides = [1, 1]} : vector<8x307xf32> to vector<8x288xf32>
    %45 = arith.maximumf %43, %44 : vector<8x288xf32>
    %46 = arith.maximumf %42, %45 : vector<8x288xf32>
    %47 = vector.extract_strided_slice %31 {offsets = [0, 0], sizes = [1, 288], strides = [1, 1]} : vector<1x307xf32> to vector<1x288xf32>
    %48 = vector.extract_strided_slice %31 {offsets = [0, 1], sizes = [1, 288], strides = [1, 1]} : vector<1x307xf32> to vector<1x288xf32>
    %49 = arith.maximumf %47, %48 : vector<1x288xf32>
    %50 = vector.extract_strided_slice %31 {offsets = [0, 18], sizes = [1, 288], strides = [1, 1]} : vector<1x307xf32> to vector<1x288xf32>
    %51 = vector.extract_strided_slice %31 {offsets = [0, 19], sizes = [1, 288], strides = [1, 1]} : vector<1x307xf32> to vector<1x288xf32>
    %52 = arith.maximumf %50, %51 : vector<1x288xf32>
    %53 = arith.maximumf %49, %52 : vector<1x288xf32>
    %54 = vector.extract_strided_slice %46 {offsets = [0, 0], sizes = [8, 18], strides = [1, 1]} : vector<8x288xf32> to vector<8x18xf32>
    %55 = vector.extract_strided_slice %46 {offsets = [0, 36], sizes = [8, 18], strides = [1, 1]} : vector<8x288xf32> to vector<8x18xf32>
    %56 = vector.extract_strided_slice %46 {offsets = [0, 72], sizes = [8, 18], strides = [1, 1]} : vector<8x288xf32> to vector<8x18xf32>
    %57 = vector.extract_strided_slice %46 {offsets = [0, 108], sizes = [8, 18], strides = [1, 1]} : vector<8x288xf32> to vector<8x18xf32>
    %58 = vector.extract_strided_slice %46 {offsets = [0, 144], sizes = [8, 18], strides = [1, 1]} : vector<8x288xf32> to vector<8x18xf32>
    %59 = vector.extract_strided_slice %46 {offsets = [0, 180], sizes = [8, 18], strides = [1, 1]} : vector<8x288xf32> to vector<8x18xf32>
    %60 = vector.extract_strided_slice %46 {offsets = [0, 216], sizes = [8, 18], strides = [1, 1]} : vector<8x288xf32> to vector<8x18xf32>
    %61 = vector.extract_strided_slice %46 {offsets = [0, 252], sizes = [8, 18], strides = [1, 1]} : vector<8x288xf32> to vector<8x18xf32>
    %62 = tpu.concatenate %54, %55, %56, %57, %58, %59, %60, %61 in 1 : vector<8x18xf32>, vector<8x18xf32>, vector<8x18xf32>, vector<8x18xf32>, vector<8x18xf32>, vector<8x18xf32>, vector<8x18xf32>, vector<8x18xf32> -> vector<8x144xf32>
    %c0_11 = arith.constant 0 : index
    %c0_12 = arith.constant 0 : index
    %c0_13 = arith.constant 0 : index
    %c0_14 = arith.constant 0 : index
    %63 = vector.load %arg4[%c0_11, %c0_12, %c0_13, %c0_14] : memref<1x1x8x144xf32, #tpu.memory_space<vmem>>, vector<1x1x8x144xf32>
    %64 = vector.shape_cast %63 : vector<1x1x8x144xf32> to vector<8x144xf32>
    %65 = vector.shape_cast %62 : vector<8x144xf32> to vector<1x1x8x144xf32>
    tpu.vector_store %arg4[%c0_11, %c0_12, %c0_13, %c0_14], %65 {strides = array<i32>} : memref<1x1x8x144xf32, #tpu.memory_space<vmem>>, vector<1x1x8x144xf32>,
    %66 = vector.extract_strided_slice %53 {offsets = [0, 0], sizes = [1, 18], strides = [1, 1]} : vector<1x288xf32> to vector<1x18xf32>
    %67 = vector.extract_strided_slice %53 {offsets = [0, 36], sizes = [1, 18], strides = [1, 1]} : vector<1x288xf32> to vector<1x18xf32>
    %68 = vector.extract_strided_slice %53 {offsets = [0, 72], sizes = [1, 18], strides = [1, 1]} : vector<1x288xf32> to vector<1x18xf32>
    %69 = vector.extract_strided_slice %53 {offsets = [0, 108], sizes = [1, 18], strides = [1, 1]} : vector<1x288xf32> to vector<1x18xf32>
    %70 = vector.extract_strided_slice %53 {offsets = [0, 144], sizes = [1, 18], strides = [1, 1]} : vector<1x288xf32> to vector<1x18xf32>
    %71 = vector.extract_strided_slice %53 {offsets = [0, 180], sizes = [1, 18], strides = [1, 1]} : vector<1x288xf32> to vector<1x18xf32>
    %72 = vector.extract_strided_slice %53 {offsets = [0, 216], sizes = [1, 18], strides = [1, 1]} : vector<1x288xf32> to vector<1x18xf32>
    %73 = vector.extract_strided_slice %53 {offsets = [0, 252], sizes = [1, 18], strides = [1, 1]} : vector<1x288xf32> to vector<1x18xf32>
    %74 = tpu.concatenate %66, %67, %68, %69, %70, %71, %72, %73 in 1 : vector<1x18xf32>, vector<1x18xf32>, vector<1x18xf32>, vector<1x18xf32>, vector<1x18xf32>, vector<1x18xf32>, vector<1x18xf32>, vector<1x18xf32> -> vector<1x144xf32>
    %c0_15 = arith.constant 0 : index
    %c0_16 = arith.constant 0 : index
    %c0_17 = arith.constant 0 : index
    %c0_18 = arith.constant 0 : index
    %75 = vector.load %arg5[%c0_15, %c0_16, %c0_17, %c0_18] : memref<1x1x1x144xf32, #tpu.memory_space<vmem>>, vector<1x1x1x144xf32>
    %76 = vector.shape_cast %75 : vector<1x1x1x144xf32> to vector<1x144xf32>
    %77 = vector.shape_cast %74 : vector<1x144xf32> to vector<1x1x1x144xf32>
    tpu.vector_store %arg5[%c0_15, %c0_16, %c0_17, %c0_18], %77 {strides = array<i32>} : memref<1x1x1x144xf32, #tpu.memory_space<vmem>>, vector<1x1x1x144xf32>,
    return
  }
  func.func @transform_0(%arg0: i32, %arg1: i32) -> (i32, i32, i32, i32) {
    %c0_i32 = arith.constant 0 : i32
    %c0_i32_0 = arith.constant 0 : i32
    %c0_i32_1 = arith.constant 0 : i32
    return %arg0, %arg1, %c0_i32, %c0_i32_0 : i32, i32, i32, i32
  }
  func.func @transform_1(%arg0: i32, %arg1: i32) -> (i32, i32) {
    %c0_i32 = arith.constant 0 : i32
    %c0_i32_0 = arith.constant 0 : i32
    %c0_i32_1 = arith.constant 0 : i32
    return %c0_i32, %c0_i32_0 : i32, i32
  }
  func.func @transform_2(%arg0: i32, %arg1: i32) -> (i32, i32, i32, i32) {
    %c0_i32 = arith.constant 0 : i32
    %c0_i32_0 = arith.constant 0 : i32
    %c0_i32_1 = arith.constant 0 : i32
    return %arg0, %arg1, %c0_i32, %c0_i32_0 : i32, i32, i32, i32
  }
  func.func @transform_3(%arg0: i32, %arg1: i32) -> (i32, i32, i32, i32) {
    %c0_i32 = arith.constant 0 : i32
    %c0_i32_0 = arith.constant 0 : i32
    %c0_i32_1 = arith.constant 0 : i32
    return %arg0, %arg1, %c0_i32, %c0_i32_0 : i32, i32, i32, i32
  }
}

</mosaic_0001>

<llo_original>
// kernel: tpu_custom_call.1
$region0: #{tpu_custom_call.1}
  #allocation0 [shape = 'u32[]', space=smem, size = 0x4, offset = 0x4, fixed_abs, tag = 'smem constant byte address 0x4 - core index']
  #allocation1 [shape = 'u32[144,128]{1,0:T(1,128)}', space=vmem, size = 0x12000, scoped, tag = 'internal scratch']
  %s0 = inlined_call_operand.vmem [shape: bf16[2,1,5,384], index: 0, kind: input, shape index: {}]
  %s1 = inlined_call_operand.vmem [shape: bf16[9,45], index: 1, kind: input, shape index: {}]
  %s2 = inlined_call_operand.hbm [shape: f32[2,1,8,144], index: 2, kind: output, shape index: {0}]
  %s3 = inlined_call_operand.hbm [shape: f32[2,1,1,144], index: 3, kind: output, shape index: {1}]
  %4 = xla_tuple %s2, %s3
  %s5 = sld [smem:[#allocation0]]
  $region49: #{tpu_custom_call.1} parent=0
    _
  %s7 = ssub.s32 1, %s5
  %s8 = scalar_select 0, %s7, %s5
  $region1: #{tpu_custom_call.1} parent=0
    #allocation2 [shape = 'u8[16384]{0}', space=vmem, size = 0x4000, scoped, tag = 'output window, operand 0']
    #allocation3 [shape = 's32[2]{0}', space=sflag, size = 0x8, scoped, tag = 'scoped memory for tpu_custom_call.1']
    #allocation4 [shape = 'u8[2048]{0}', space=vmem, size = 0x800, scoped, tag = 'output window, operand 1']
    #allocation5 [shape = 's32[2]{0}', space=sflag, size = 0x8, scoped, tag = 'scoped memory for tpu_custom_call.1']
    %9 = vsyncpa [#allocation3], 0
    %s10 = scalar_lea.sflag [#allocation3], 1
    %11 = vsyncpa %s10, 0
    %12 = vsyncpa [#allocation5], 0
    %s13 = scalar_lea.sflag [#allocation5], 1
    %14 = vsyncpa %s13, 0
    loop: start=0, step=1, limit=4
    $region2: #{tpu_custom_call.1} parent=1 // loop_pre_header
      _
    $region3: #{tpu_custom_call.1} parent=1 // loop_header
      %s16 = sphi 0, %s20
      %p17 = scmp.ge.s32.totalorder %s16, 4
      %s23 = sphi 0, %s35
      %s24 = sphi 0, %s31
      %s25 = sphi 0, %s23
      %s26 = sphi 0, %s24
      %s27 = sphi 0, %s25
      %s28 = sphi 0, %s26
      %s40 = sphi 0, %s42
      %s43 = sphi 0, %s40
      %s44 = sphi 0, %s43
      %s60 = sphi 0, %s44
      %s64 = sphi 0, %s64
      %s66 = sphi 0, %s64
      %s67 = sphi 0, %s66
      %s81 = sphi 0, %s67
      %s89 = sphi 0, %s91
      %s92 = sphi 0, %s89
      %s93 = sphi 0, %s92
      %s109 = sphi 0, %s93
      %s117 = sphi 0, %s119
      %s120 = sphi 0, %s117
      %s121 = sphi 0, %s120
      %s137 = sphi 0, %s121
    $region4: #{tpu_custom_call.1} parent=1 // loop_header_branch
      %19 = sbr.rel (%p17) target = $region8
    $region5: #{tpu_custom_call.1} parent=1 // loop_body
      %s21 = ssub.s32 %s16, 1
      %s22 = ssub.s32 %s16, 2
      %s29 = sadd.s32 1, %s24
      %p30 = scmp.ge.s32.totalorder %s29, 1
      %s31 = scalar_select %p30, 0, %s29
      %s32 = sadd.s32 1, %s23
      %s33 = scalar_select %p30, %s32, %s23
      %p34 = scmp.ge.s32.totalorder %s33, 2
      %s35 = scalar_select %p34, 0, %s33
      %s36 = ssub.s32 %s23, %s35
      %s37 = ssub.s32 %s24, %s31
      %s38 = sor.u32 %s36, %s37
      %p39 = scmp.eq.s32.totalorder %s38, 0
      %s41 = sadd.s32 %s40, 1
      %s42 = scalar_select %p39, %s40, %s41
      %p45 = pneg %p39
      %p46 = scmp.eq.s32.totalorder %s16, 1
      %p47 = por %p45, %p46
      %p48 = scmp.ne.s32.totalorder %s40, %s43
      %p49 = scmp.eq.s32.totalorder %s16, 0
      %p50 = por %p48, %p49
      %p51 = scmp.ne.s32.totalorder %s40, %s43
      %p52 = scmp.eq.s32.totalorder %s21, 1
      %p53 = por %p51, %p52
      %p54 = scmp.ne.s32.totalorder %s43, %s44
      %p55 = scmp.eq.s32.totalorder %s21, 0
      %p56 = por %p54, %p55
      %p57 = scmp.ne.s32.totalorder %s43, %s44
      %p58 = scmp.eq.s32.totalorder %s22, 1
      %p59 = por %p57, %p58
      %p61 = scmp.ne.s32.totalorder %s44, %s60
      %p62 = scmp.eq.s32.totalorder %s22, 0
      %p63 = por %p61, %p62
      %s65 = sadd.s32 %s64, 1
      %p68 = scmp.eq.s32.totalorder %s16, 1
      %p69 = scmp.ne.s32.totalorder %s64, %s66
      %p70 = scmp.eq.s32.totalorder %s16, 0
      %p71 = por %p69, %p70
      %p72 = scmp.ne.s32.totalorder %s64, %s66
      %p73 = scmp.eq.s32.totalorder %s21, 1
      %p74 = por %p72, %p73
      %p75 = scmp.ne.s32.totalorder %s66, %s67
      %p76 = scmp.eq.s32.totalorder %s21, 0
      %p77 = por %p75, %p76
      %p78 = scmp.ne.s32.totalorder %s66, %s67
      %p79 = scmp.eq.s32.totalorder %s22, 1
      %p80 = por %p78, %p79
      %p82 = scmp.ne.s32.totalorder %s67, %s81
      %p83 = scmp.eq.s32.totalorder %s22, 0
      %p84 = por %p82, %p83
      %s85 = ssub.s32 %s23, %s35
      %s86 = ssub.s32 %s24, %s31
      %s87 = sor.u32 %s85, %s86
      %p88 = scmp.eq.s32.totalorder %s87, 0
      %s90 = sadd.s32 %s89, 1
      %s91 = scalar_select %p88, %s89, %s90
      %p94 = pneg %p88
      %p95 = scmp.eq.s32.totalorder %s16, 1
      %p96 = por %p94, %p95
      %p97 = scmp.ne.s32.totalorder %s89, %s92
      %p98 = scmp.eq.s32.totalorder %s16, 0
      %p99 = por %p97, %p98
      %p100 = scmp.ne.s32.totalorder %s89, %s92
      %p101 = scmp.eq.s32.totalorder %s21, 1
      %p102 = por %p100, %p101
      %p103 = scmp.ne.s32.totalorder %s92, %s93
      %p104 = scmp.eq.s32.totalorder %s21, 0
      %p105 = por %p103, %p104
      %p106 = scmp.ne.s32.totalorder %s92, %s93
      %p107 = scmp.eq.s32.totalorder %s22, 1
      %p108 = por %p106, %p107
      %p110 = scmp.ne.s32.totalorder %s93, %s109
      %p111 = scmp.eq.s32.totalorder %s22, 0
      %p112 = por %p110, %p111
      %s113 = ssub.s32 %s23, %s35
      %s114 = ssub.s32 %s24, %s31
      %s115 = sor.u32 %s113, %s114
      %p116 = scmp.eq.s32.totalorder %s115, 0
      %s118 = sadd.s32 %s117, 1
      %s119 = scalar_select %p116, %s117, %s118
      %p122 = pneg %p116
      %p123 = scmp.eq.s32.totalorder %s16, 1
      %p124 = por %p122, %p123
      %p125 = scmp.ne.s32.totalorder %s117, %s120
      %p126 = scmp.eq.s32.totalorder %s16, 0
      %p127 = por %p125, %p126
      %p128 = scmp.ne.s32.totalorder %s117, %s120
      %p129 = scmp.eq.s32.totalorder %s21, 1
      %p130 = por %p128, %p129
      %p131 = scmp.ne.s32.totalorder %s120, %s121
      %p132 = scmp.eq.s32.totalorder %s21, 0
      %p133 = por %p131, %p132
      %p134 = scmp.ne.s32.totalorder %s120, %s121
      %p135 = scmp.eq.s32.totalorder %s22, 1
      %p136 = por %p134, %p135
      %p138 = scmp.ne.s32.totalorder %s121, %s137
      %p139 = scmp.eq.s32.totalorder %s22, 0
      %p140 = por %p138, %p139
      %p141 = scmp.le.s32.totalorder 1, %s16
      %p142 = scmp.lt.s32.totalorder %s16, 3
      %p143 = pnand %p141, %p142
      %p144 = pneg %p143
      // Predicated region
      $region9: #{tpu_custom_call.1} parent=5 // pred_check
        _
      $region10: #{tpu_custom_call.1} parent=5 // pred_check_branch
        %146 = sbr.rel (%p143) target = $region12
      $region11: #{tpu_custom_call.1} parent=5 // pred_region
        %s147 = ssub.s32 %s16, 1
        // Predicated region
        $region13: #{tpu_custom_call.1} parent=11 // pred_check
          %p148 = pneg %p77
        $region14: #{tpu_custom_call.1} parent=11 // pred_check_branch
          %150 = sbr.rel (%p148) target = $region16
        $region15: #{tpu_custom_call.1} parent=11 // pred_region
          _
        $region16: #{tpu_custom_call.1} parent=11 // pred_fallthru
          _
      $region12: #{tpu_custom_call.1} parent=5 // pred_fallthru
        _
      %p151 = scmp.lt.s32.totalorder %s16, 2
      // Predicated region
      $region17: #{tpu_custom_call.1} parent=5 // pred_check
        %p152 = pneg %p151
      $region18: #{tpu_custom_call.1} parent=5 // pred_check_branch
        %154 = sbr.rel (%p152) target = $region20
      $region19: #{tpu_custom_call.1} parent=5 // pred_region
        // Predicated region
        $region21: #{tpu_custom_call.1} parent=19 // pred_check
          %p155 = pneg %p50
        $region22: #{tpu_custom_call.1} parent=19 // pred_check_branch
          %157 = sbr.rel (%p155) target = $region24
        $region23: #{tpu_custom_call.1} parent=19 // pred_region
          %p158 = scmp.lt.s32.totalorder %s23, 1
          %s159 = scalar_select %p158, %s23, 1
          %p160 = scmp.lt.s32.totalorder %s24, 0
          %s161 = scalar_select %p160, %s24, 0
          %s162 = smul.addr %s161, 3
          %s163 = smul.addr %s159, 3
          %s164 = sadd.s32 %s162, %s163
          %s165 = smul.addr %s164, 4
          %s166 = scalar_lea.vmem %s0, %s165
        $region24: #{tpu_custom_call.1} parent=19 // pred_fallthru
          _
      $region20: #{tpu_custom_call.1} parent=5 // pred_fallthru
        _
      %p167 = scmp.le.s32.totalorder 1, %s16
      %p168 = scmp.lt.s32.totalorder %s16, 3
      %p169 = pnand %p167, %p168
      %p170 = pneg %p169
      // Predicated region
      $region25: #{tpu_custom_call.1} parent=5 // pred_check
        _
      $region26: #{tpu_custom_call.1} parent=5 // pred_check_branch
        %172 = sbr.rel (%p169) target = $region28
      $region27: #{tpu_custom_call.1} parent=5 // pred_region
        %s173 = ssub.s32 %s16, 1
        %p174 = scmp.lt.s32.totalorder %s25, 1
        %s175 = scalar_select %p174, %s25, 1
        %p176 = scmp.lt.s32.totalorder %s26, 0
        %s177 = scalar_select %p176, %s26, 0
        %s178 = smul.addr %s177, 3
        %s179 = smul.addr %s175, 3
        %s180 = sadd.s32 %s178, %s179
        %s181 = smul.addr %s180, 4
        %s182 = scalar_lea.vmem %s0, %s181
        %p183 = pneg %p56
        %p184 = pneg %p53
        %p185 = pneg %p77
        %p186 = pneg %p74
        %p187 = pneg %p105
        %p188 = pneg %p102
        %s189 = sand.u32 %s92, 1
        %s190 = scalar_lea.sflag [#allocation3], %s189
        %s191 = sand.u32 %s92, 1
        %s192 = smul.addr %s191, 16
        %s193 = scalar_lea.vmem [#allocation2], %s192
        %p194 = pneg %p133
        %p195 = pneg %p130
        %s196 = sand.u32 %s120, 1
        %s197 = scalar_lea.sflag [#allocation5], %s196
        %s198 = sand.u32 %s120, 1
        %s199 = smul.addr %s198, 2
        %s200 = scalar_lea.vmem [#allocation4], %s199
        %p201 = scmp.lt.s32.totalorder %s25, 1
        %s202 = scalar_select %p201, %s25, 1
        %p203 = scmp.lt.s32.totalorder %s26, 0
        %s204 = scalar_select %p203, %s26, 0
        %s205 = smul.addr %s204, 3
        %s206 = smul.addr %s202, 3
        %s207 = sadd.s32 %s205, %s206
        %s208 = smul.addr %s207, 4
        %s209 = scalar_lea.vmem %s0, %s208
        %v211 = vld [vmem:[%s209] sm:$0x77]
        %v212 = vld [vmem:[%s209 + $0x8] sm:$0x7]
        %v215 = vunpack.c.l.b16 %v211
        %v216 = vunpack.c.h.b16 %v211
        %v217 = vunpack.c.l.b16 %v212
        %v218 = vpack.c.b16 %v215, %v215
        %v219 = vpack.c.b16 %v216, %v216
        %v220 = vpack.c.b16 %v217, %v217
        %v222 = vpack.i.b16 %v218, %v218
        %v224 = vlaneseq
        %v225 = vshrl.u32 %v224, 7
        %v226 = vsub.s32 2, %v225
        %v227 = vrot.slane %v222, %v226
        %v229 = vpack.i.b16 %v219, %v219
        %v231 = vlaneseq
        %v232 = vshrl.u32 %v231, 7
        %v233 = vsub.s32 2, %v232
        %v234 = vrot.slane %v229, %v233
        %v236 = vpack.i.b16 %v220, %v220
        %v238 = vlaneseq
        %v239 = vshrl.u32 %v238, 7
        %v240 = vsub.s32 2, %v239
        %v241 = vrot.slane %v236, %v240
        %v245 = vunpack.c.l.b16 %v227
        %v246 = vunpack.c.l.b16 %v234
        %v247 = vunpack.c.l.b16 %v241
        %v248 = vpack.c.b16 %v246, %v245
        %v249 = vpack.c.b16 %v247, %v247
        %v252 = vmul.bf16 %v211, %v248
        %v253 = vmul.bf16 %v212, %v249
        %v254 = vmul.bf16 %v252, %v248
        %v255 = vmul.bf16 %v253, %v249
        %v258 = vunpack.c.l.b16 %v254
        %v259 = vunpack.c.h.b16 %v254
        %v260 = vunpack.c.l.b16 %v255
        %v261 = vpack.c.b16 %v258, %v258
        %v262 = vpack.c.b16 %v259, %v259
        %v263 = vpack.c.b16 %v260, %v260
        %vm264 = vcmask 1041408
        %v266 = vsel %vm264, %v261, %v218
        %v269 = vsel %vm264, %v262, %v219
        %v272 = vsel %vm264, %v263, %v220
        %v274 = vshrl.u32 %v266, 16
        %v276 = vrot.slane %v274, 5
        %v277 = vshll.u32 %v266, 16
        %v279 = vrot.slane %v277, 6
        %v280 = vor.u32 %v276, %v279
        %v281 = vshrl.u32 %v269, 16
        %v283 = vrot.slane %v281, 5
        %v284 = vshll.u32 %v269, 16
        %v286 = vrot.slane %v284, 6
        %v287 = vor.u32 %v283, %v286
        %v288 = vshrl.u32 %v272, 16
        %v290 = vrot.slane %v288, 5
        %v291 = vshll.u32 %v272, 16
        %v293 = vrot.slane %v291, 6
        %v294 = vor.u32 %v290, %v293
        %295 = vrot.lane.b32.xlu0 %v280, 127
        %v296 = vpop.permute.xlu0 %295
        %297 = vrot.lane.b32.xlu0 %v287, 127
        %v298 = vpop.permute.xlu0 %297
        %299 = vrot.lane.b32.xlu0 %v294, 127
        %v300 = vpop.permute.xlu0 %299
        %vm301 = vcmask 1039360
        %v302 = vsel %vm301, %v296, %v298
        %v303 = vsel %vm301, %v298, %v300
        %v310 = vrot.slane %v266, 3
        %v311 = vrot.slane %v269, 3
        %v312 = vrot.slane %v272, 3
        %313 = vrot.lane.b32.xlu0 %v310, 126
        %v314 = vpop.permute.xlu0 %313
        %315 = vrot.lane.b32.xlu0 %v311, 126
        %v316 = vpop.permute.xlu0 %315
        %317 = vrot.lane.b32.xlu0 %v312, 126
        %v318 = vpop.permute.xlu0 %317
        %vm319 = vcmask 1031168
        %v320 = vsel %vm319, %v314, %v316
        %v321 = vsel %vm319, %v316, %v318
        %v322 = vrot.slane %v277, 1
        %v323 = vrot.slane %v284, 1
        %v324 = vrot.slane %v291, 1
        %v325 = vor.u32 %v274, %v322
        %v326 = vor.u32 %v281, %v323
        %v327 = vor.u32 %v288, %v324
        %328 = vrot.lane.b32.xlu0 %v322, 110
        %v329 = vpop.permute.xlu0 %328
        %330 = vrot.lane.b32.xlu0 %v323, 110
        %v331 = vpop.permute.xlu0 %330
        %332 = vrot.lane.b32.xlu0 %v324, 110
        %v333 = vpop.permute.xlu0 %332
        %334 = vrot.lane.b32.xlu0 %v325, 110
        %v335 = vpop.permute.xlu0 %334
        %336 = vrot.lane.b32.xlu0 %v326, 110
        %v337 = vpop.permute.xlu0 %336
        %338 = vrot.lane.b32.xlu0 %v327, 110
        %v339 = vpop.permute.xlu0 %338
        %vm340 = vcmask 900096
        %v341 = vsel %vm340, %v329, %v331
        %v342 = vsel %vm340, %v331, %v333
        %v343 = vsel %vm340, %v335, %v337
        %v344 = vsel %vm340, %v337, %v339
        %v348 = vrot.slane %v266, 6
        %v349 = vrot.slane %v269, 6
        %v350 = vrot.slane %v272, 6
        %351 = vrot.lane.b32.xlu0 %v348, 109
        %v352 = vpop.permute.xlu0 %351
        %353 = vrot.lane.b32.xlu0 %v349, 109
        %v354 = vpop.permute.xlu0 %353
        %355 = vrot.lane.b32.xlu0 %v350, 109
        %v356 = vpop.permute.xlu0 %355
        %vm357 = vcmask 891904
        %v358 = vsel %vm357, %v352, %v354
        %v359 = vsel %vm357, %v354, %v356
        %v360 = vrot.slane %v274, 3
        %v361 = vrot.slane %v277, 4
        %v362 = vor.u32 %v360, %v361
        %v363 = vrot.slane %v281, 3
        %v364 = vrot.slane %v284, 4
        %v365 = vor.u32 %v363, %v364
        %v366 = vrot.slane %v288, 3
        %v367 = vrot.slane %v291, 4
        %v368 = vor.u32 %v366, %v367
        %369 = vrot.lane.b32.xlu0 %v362, 108
        %v370 = vpop.permute.xlu0 %369
        %371 = vrot.lane.b32.xlu0 %v365, 108
        %v372 = vpop.permute.xlu0 %371
        %373 = vrot.lane.b32.xlu0 %v368, 108
        %v374 = vpop.permute.xlu0 %373
        %vm375 = vcmask 883712
        %v376 = vsel %vm375, %v370, %v372
        %v377 = vsel %vm375, %v372, %v374
        %v381 = vrot.slane %v266, 1
        %v382 = vrot.slane %v269, 1
        %v383 = vrot.slane %v272, 1
        %384 = vrot.lane.b32.xlu0 %v381, 92
        %v385 = vpop.permute.xlu0 %384
        %386 = vrot.lane.b32.xlu0 %v382, 92
        %v387 = vpop.permute.xlu0 %386
        %388 = vrot.lane.b32.xlu0 %v383, 92
        %v389 = vpop.permute.xlu0 %388
        %vm390 = vcmask 752640
        %v391 = vsel %vm390, %v385, %v387
        %v392 = vsel %vm390, %v387, %v389
        %v396 = vrot.slane %v274, 6
        %v397 = vrot.slane %v277, 7
        %v398 = vor.u32 %v396, %v397
        %v399 = vrot.slane %v281, 6
        %v400 = vrot.slane %v284, 7
        %v401 = vor.u32 %v399, %v400
        %v402 = vrot.slane %v288, 6
        %v403 = vrot.slane %v291, 7
        %v404 = vor.u32 %v402, %v403
        %405 = vrot.lane.b32.xlu0 %v398, 91
        %v406 = vpop.permute.xlu0 %405
        %407 = vrot.lane.b32.xlu0 %v401, 91
        %v408 = vpop.permute.xlu0 %407
        %409 = vrot.lane.b32.xlu0 %v404, 91
        %v410 = vpop.permute.xlu0 %409
        %vm411 = vcmask 744448
        %v412 = vsel %vm411, %v406, %v408
        %v413 = vsel %vm411, %v408, %v410
        %v417 = vrot.slane %v266, 4
        %v418 = vrot.slane %v269, 4
        %v419 = vrot.slane %v272, 4
        %420 = vrot.lane.b32.xlu0 %v417, 90
        %v421 = vpop.permute.xlu0 %420
        %422 = vrot.lane.b32.xlu0 %v418, 90
        %v423 = vpop.permute.xlu0 %422
        %424 = vrot.lane.b32.xlu0 %v419, 90
        %v425 = vpop.permute.xlu0 %424
        %vm426 = vcmask 736256
        %v427 = vsel %vm426, %v421, %v423
        %v428 = vsel %vm426, %v423, %v425
        %vm429 = vcmask 1042432
        %vm430 = vsmask.f32 2304
        %vm431 = vmand %vm429, %vm430
        %v432 = vsel %vm431, %v266, %v302
        %v433 = vsel %vm431, %v269, %v303
        %v434 = vsel %vm431, %v272, %v300
        %vm435 = vcmask 1044480
        %v438 = vsel %vm435, %v432, %v320
        %v442 = vsel %vm435, %v433, %v321
        %v446 = vsel %vm435, %v434, %v318
        %vm448 = vcmask 1047552
        %vm449 = vsmask.f32 7424
        %vm450 = vmand %vm448, %vm449
        %v451 = vsel %vm450, %v438, %v341
        %v452 = vsel %vm450, %v442, %v342
        %v453 = vsel %vm450, %v446, %v333
        %v456 = vsel %vm264, %v343, %v358
        %v460 = vsel %vm264, %v344, %v359
        %v464 = vsel %vm264, %v339, %v356
        %vm466 = vcmask 1044480
        %vm467 = vsmask.f32 4352
        %vm468 = vmand %vm466, %vm467
        %v469 = vsel %vm468, %v456, %v376
        %v470 = vsel %vm468, %v460, %v377
        %v471 = vsel %vm468, %v464, %v374
        %vm472 = vcmask 1046528
        %v475 = vsel %vm472, %v469, %v391
        %v479 = vsel %vm472, %v470, %v392
        %v483 = vsel %vm472, %v471, %v389
        %vm485 = vcmask 1041408
        %vm486 = vsmask.f32 1280
        %vm487 = vmand %vm485, %vm486
        %v488 = vsel %vm487, %v391, %v412
        %v489 = vsel %vm487, %v392, %v413
        %v490 = vsel %vm487, %v389, %v410
        %vm491 = vcmask 1043456
        %v494 = vsel %vm491, %v488, %v427
        %v497 = vsel %vm491, %v489, %v428
        %v500 = vsel %vm491, %v490, %v425
        %v501 = vld [vmem:[%s1] sm:$0xf]
        %v502 = vld [vmem:[%s1 + $0x4] sm:$0x1]
        %v505 = vunpack.c.l.b16 %v501
        %v506 = vunpack.c.l.b16 %v502
        %v507 = vpack.c.b16 %v506, %v505
        %vm508 = vcmask 367616
        %v510 = vsel %vm508, %v507, 0
        %vm512 = vcmask 1045504
        %v513 = vsel %vm512, 4294967295, 65535
        %v514 = vsel %vm472, %v513, 0
        %v515 = vand.u32 %v494, %v514
        %v517 = vand.u32 %v497, %v514
        %v519 = vand.u32 %v500, %v514
        %521 = vmatprep.subr.bf16.mxu0 %v452
        %522 = vmatpush1.bf16.msra.mxu0 %v451
        %523 = vmatprep.subr.bf16.mxu0 %v479
        %524 = vmatpush1.bf16.msra.mxu0 %v475
        %525 = vmatprep.subr.bf16.mxu0 %v517
        %526 = vmatpush1.bf16.msra.mxu0 %v515
        %527 = vmatprep.subr.bf16.mxu0 0
        %528 = vmatpush1.bf16.msra.mxu0 0
        %529 = vmatprep.subr.bf16.mxu0 0
        %530 = vmatpush1.bf16.msra.mxu0 0
        %531 = vmatprep.subr.bf16.mxu0 0
        %532 = vmatpush1.bf16.msra.mxu0 0
        %533 = vmatprep.subr.bf16.mxu0 0
        %534 = vmatpush1.bf16.msra.mxu0 0
        %535 = vmatprep.subr.bf16.mxu0 0
        %536 = vmatpush1.bf16.msra.mxu0 0
        %537 = vmatprep.subr.bf16.mxu0 0
        %538 = vmatpush1.bf16.msra.mxu0 0
        %539 = vmatprep.subr.bf16.mxu0 0
        %540 = vmatpush1.bf16.msra.mxu0 0
        %541 = vmatprep.subr.bf16.mxu0 0
        %542 = vmatpush1.bf16.msra.mxu0 0
        %543 = vmatprep.subr.bf16.mxu0 0
        %544 = vmatpush1.bf16.msra.mxu0 0
        %545 = vmatprep.subr.bf16.mxu0 0
        %546 = vmatpush1.bf16.msra.mxu0 0
        %547 = vmatprep.subr.bf16.mxu0 0
        %548 = vmatpush1.bf16.msra.mxu0 0
        %549 = vmatprep.subr.bf16.mxu0 0
        %550 = vmatpush1.bf16.msra.mxu0 0
        %551 = vmatprep.subr.bf16.mxu0 0
        %552 = vmatpush1.bf16.msra.mxu0 0
        %553 = vmatprep.mubr.bf16.mxu0 0
        %554 = vmatmul.mubr.bf16.gmra.mrb[0].mxu0 %v510
        %v555 = vpop.f32.mrb[0].mxu0
        %v556 = vadd.f32 0.0, %v555
        %v557 = vpop.f32.mrb[0].mxu0
        %v558 = vadd.f32 0.0, %v557
        %v559 = vpop.f32.mrb[0].mxu0
        %v560 = vadd.f32 0.0, %v559
        %v561 = vpop.f32.mrb[0].mxu0
        %v562 = vadd.f32 0.0, %v561
        %563 = vdwg.mxu0
        %564 = vmatprep.subr.bf16.mxu0 0
        %565 = vmatpush1.bf16.msra.mxu0 %v453
        %566 = vmatprep.subr.bf16.mxu0 0
        %567 = vmatpush1.bf16.msra.mxu0 %v483
        %568 = vmatprep.subr.bf16.mxu0 0
        %569 = vmatpush1.bf16.msra.mxu0 %v519
        %570 = vmatprep.subr.bf16.mxu0 0
        %571 = vmatpush1.bf16.msra.mxu0 0
        %572 = vmatprep.subr.bf16.mxu0 0
        %573 = vmatpush1.bf16.msra.mxu0 0
        %574 = vmatprep.subr.bf16.mxu0 0
        %575 = vmatpush1.bf16.msra.mxu0 0
        %576 = vmatprep.subr.bf16.mxu0 0
        %577 = vmatpush1.bf16.msra.mxu0 0
        %578 = vmatprep.subr.bf16.mxu0 0
        %579 = vmatpush1.bf16.msra.mxu0 0
        %580 = vmatprep.subr.bf16.mxu0 0
        %581 = vmatpush1.bf16.msra.mxu0 0
        %582 = vmatprep.subr.bf16.mxu0 0
        %583 = vmatpush1.bf16.msra.mxu0 0
        %584 = vmatprep.subr.bf16.mxu0 0
        %585 = vmatpush1.bf16.msra.mxu0 0
        %586 = vmatprep.subr.bf16.mxu0 0
        %587 = vmatpush1.bf16.msra.mxu0 0
        %588 = vmatprep.subr.bf16.mxu0 0
        %589 = vmatpush1.bf16.msra.mxu0 0
        %590 = vmatprep.subr.bf16.mxu0 0
        %591 = vmatpush1.bf16.msra.mxu0 0
        %592 = vmatprep.subr.bf16.mxu0 0
        %593 = vmatpush1.bf16.msra.mxu0 0
        %594 = vmatprep.subr.bf16.mxu0 0
        %595 = vmatpush1.bf16.msra.mxu0 0
        %596 = vmatprep.mubr.bf16.mxu0 0
        %597 = vmatmul.mubr.bf16.gmra.mrb[0].mxu0 %v510
        %v598 = vpop.f32.mrb[0].mxu0
        %v599 = vadd.f32 0.0, %v598
        %v600 = vpop.f32.mrb[0].mxu0
        %v601 = vpop.f32.mrb[0].mxu0
        %v602 = vadd.f32 0.0, %v601
        %v603 = vpop.f32.mrb[0].mxu0
        %604 = vdwg.mxu0
        %v605 = vadd.f32 %v560, 1e-08
        %v606 = vadd.f32 %v562, 1e-08
        %v607 = vadd.f32 %v602, 1e-08
        %v608 = vrcp.pop %v605
        %v609 = vrcp.pop %v606
        %v610 = vrcp.pop %v607
        %v611 = vmul.f32 %v608, 9.0
        %v612 = vmul.f32 %v609, 9.0
        %v613 = vmul.f32 %v610, 9.0
        %v614 = vmax.f32 %v560, 0.0
        %v615 = vmax.f32 %v562, 0.0
        %v616 = vmax.f32 %v602, 0.0
        %v617 = vmin.f32 %v614, 1.0
        %v618 = vmin.f32 %v615, 1.0
        %v619 = vmin.f32 %v616, 1.0
        %v620 = vmul.f32 %v611, %v617
        %v621 = vmul.f32 %v612, %v618
        %v622 = vmul.f32 %v613, %v619
        %v623 = vlaneseq
        %v624 = vshrl.u32 %v623, 7
        %v625 = vsub.s32 0, %v624
        %v626 = vrot.slane %v620, %v625
        %v627 = vlaneseq
        %v628 = vshrl.u32 %v627, 7
        %v629 = vsub.s32 0, %v628
        %v630 = vrot.slane %v621, %v629
        %v631 = vlaneseq
        %v632 = vshrl.u32 %v631, 7
        %v633 = vsub.s32 0, %v632
        %v634 = vrot.slane %v622, %v633
        %v635 = vmul.f32 %v556, %v626
        %v636 = vmul.f32 %v558, %v630
        %v637 = vmul.f32 %v599, %v634
        %vm638 = vcmp.ge.f32.partialorder %v635, 0.0
        %vm639 = vcmp.ge.f32.partialorder %v636, 0.0
        %vm640 = vcmp.ge.f32.partialorder %v637, 0.0
        %v641 = vmul.f32 %v635, 0.1
        %v642 = vmul.f32 %v636, 0.1
        %v643 = vmul.f32 %v637, 0.1
        %v644 = vsel %vm638, %v635, %v641
        %v645 = vsel %vm639, %v636, %v642
        %v646 = vsel %vm640, %v637, %v643
        %650 = vrot.lane.b32.xlu0 %v644, 127
        %v651 = vpop.permute.xlu0 %650
        %652 = vrot.lane.b32.xlu0 %v645, 127
        %v653 = vpop.permute.xlu0 %652
        %654 = vrot.lane.b32.xlu0 %v646, 127
        %v655 = vpop.permute.xlu0 %654
        %vm656 = vcmask 1039360
        %v657 = vsel %vm656, %v651, %v653
        %v658 = vsel %vm656, %v653, %v655
        %v662 = vmax.f32 %v644, %v657
        %v663 = vmax.f32 %v645, %v658
        %v664 = vmax.f32 %v646, %v655
        %668 = vrot.lane.b32.xlu0 %v662, 110
        %v669 = vpop.permute.xlu0 %668
        %670 = vrot.lane.b32.xlu0 %v663, 110
        %v671 = vpop.permute.xlu0 %670
        %672 = vrot.lane.b32.xlu0 %v664, 110
        %v673 = vpop.permute.xlu0 %672
        %vm674 = vcmask 900096
        %v675 = vsel %vm674, %v669, %v671
        %v676 = vsel %vm674, %v671, %v673
        %v680 = vmax.f32 %v662, %v675
        %v681 = vmax.f32 %v663, %v676
        %v682 = vmax.f32 %v664, %v673
        %686 = vrot.lane.b32.xlu0 %v617, 127
        %v687 = vpop.permute.xlu0 %686
        %688 = vrot.lane.b32.xlu0 %v618, 127
        %v689 = vpop.permute.xlu0 %688
        %690 = vrot.lane.b32.xlu0 %v619, 127
        %v691 = vpop.permute.xlu0 %690
        %v692 = vsel %vm656, %v687, %v689
        %v693 = vsel %vm656, %v689, %v691
        %v697 = vmax.f32 %v617, %v692
        %v698 = vmax.f32 %v618, %v693
        %v699 = vmax.f32 %v619, %v691
        %703 = vrot.lane.b32.xlu0 %v697, 110
        %v704 = vpop.permute.xlu0 %703
        %705 = vrot.lane.b32.xlu0 %v698, 110
        %v706 = vpop.permute.xlu0 %705
        %707 = vrot.lane.b32.xlu0 %v699, 110
        %v708 = vpop.permute.xlu0 %707
        %v709 = vsel %vm674, %v704, %v706
        %v710 = vsel %vm674, %v706, %v708
        %v714 = vmax.f32 %v697, %v709
        %v715 = vmax.f32 %v698, %v710
        %v716 = vmax.f32 %v699, %v708
        %718 = vrot.lane.b32.xlu0 %v680, 110
        %v719 = vpop.permute.xlu0 %718
        %721 = vrot.lane.b32.xlu0 %v680, 92
        %v722 = vpop.permute.xlu0 %721
        %724 = vrot.lane.b32.xlu0 %v680, 74
        %v725 = vpop.permute.xlu0 %724
        %728 = vrot.lane.b32.xlu0 %v681, 56
        %v729 = vpop.permute.xlu0 %728
        %731 = vrot.lane.b32.xlu0 %v681, 38
        %v732 = vpop.permute.xlu0 %731
        %734 = vrot.lane.b32.xlu0 %v681, 20
        %v735 = vpop.permute.xlu0 %734
        %738 = vrot.lane.b32.xlu0 %v681, 2
        %v739 = vpop.permute.xlu0 %738
        %740 = vrot.lane.b32.xlu0 %v682, 2
        %v741 = vpop.permute.xlu0 %740
        %vm742 = vcmask 15360
        %v743 = vsel %vm742, %v739, %v741
        %vm746 = vcmask 146432
        %v747 = vsel %vm746, %v680, %v719
        %vm748 = vcmask 293888
        %v749 = vsel %vm748, %v747, %v722
        %vm750 = vcmask 441344
        %v751 = vsel %vm750, %v749, %v725
        %vm752 = vcmask 588800
        %v753 = vsel %vm752, %v751, %v729
        %vm754 = vcmask 736256
        %v755 = vsel %vm754, %v753, %v732
        %vm756 = vcmask 883712
        %v757 = vsel %vm756, %v755, %v735
        %vm758 = vcmask 1031168
        %v759 = vsel %vm758, %v757, %v739
        %760 = vst [vmem:[%s193] sm:$0xff] %v759
        %vm761 = vcmask 130048
        %762 = vst.msk [vmem:[%s193 + $0x8] sm:$0xff] %vm761, %v743
        %764 = vrot.lane.b32.xlu0 %v714, 110
        %v765 = vpop.permute.xlu0 %764
        %767 = vrot.lane.b32.xlu0 %v714, 92
        %v768 = vpop.permute.xlu0 %767
        %770 = vrot.lane.b32.xlu0 %v714, 74
        %v771 = vpop.permute.xlu0 %770
        %774 = vrot.lane.b32.xlu0 %v715, 56
        %v775 = vpop.permute.xlu0 %774
        %777 = vrot.lane.b32.xlu0 %v715, 38
        %v778 = vpop.permute.xlu0 %777
        %780 = vrot.lane.b32.xlu0 %v715, 20
        %v781 = vpop.permute.xlu0 %780
        %784 = vrot.lane.b32.xlu0 %v715, 2
        %v785 = vpop.permute.xlu0 %784
        %786 = vrot.lane.b32.xlu0 %v716, 2
        %v787 = vpop.permute.xlu0 %786
        %v788 = vsel %vm742, %v785, %v787
        %v790 = vsel %vm746, %v714, %v765
        %v791 = vsel %vm748, %v790, %v768
        %v792 = vsel %vm750, %v791, %v771
        %v793 = vsel %vm752, %v792, %v775
        %v794 = vsel %vm754, %v793, %v778
        %v795 = vsel %vm756, %v794, %v781
        %v796 = vsel %vm758, %v795, %v785
        %v798 = vcombine.low %v796, %v788
        %v800 = vunpack.c.l.s4 1966171168
        %v801 = vunpack.c.0.s8 %v800
        %v802 = vlaneseq
        %v803 = vshrl.u32 %v802, 7
        %v804 = vsub.s32 %v801, %v803
        %v805 = vrot.slane %v798, %v804
        %v807 = vunpack.c.l.s4 1966171168
        %v808 = vunpack.c.0.s8 %v807
        %v809 = vlaneseq
        %v810 = vshrl.u32 %v809, 7
        %v811 = vsub.s32 %v808, %v810
        %v812 = vrot.slane %v805, %v811
        %v814 = vlaneseq
        %vm815 = vcmp.ge.s32.totalorder %v814, 0
        %vm816 = vcmp.lt.s32.totalorder %v814, 144
        %vm817 = vmand %vm815, %vm816
        %818 = vst.msk [vmem:[%s200] sm:$0x3] %vm817, %v812
        %s819 = sand.u32 %s92, 1
        %s820 = scalar_lea.sflag [#allocation3], %s819
        %s821 = sand.u32 %s92, 1
        %s822 = smul.addr %s821, 16
        %s823 = scalar_lea.vmem [#allocation2], %s822
        %s824 = sand.u32 %s120, 1
        %s825 = scalar_lea.sflag [#allocation5], %s824
        %s826 = sand.u32 %s120, 1
        %s827 = smul.addr %s826, 2
        %s828 = scalar_lea.vmem [#allocation4], %s827
        // Predicated region
        $region29: #{tpu_custom_call.1} parent=27 // pred_check
          %p829 = pneg %p102
        $region30: #{tpu_custom_call.1} parent=27 // pred_check_branch
          %831 = sbr.rel (%p829) target = $region32
        $region31: #{tpu_custom_call.1} parent=27 // pred_region
          %s833 = ssub.s32 256, 256
          %834 = vsyncadd %s820, %s833
          %s835 = smul.addr %s26, 2
          %s836 = smul.addr %s25, 2
          %s837 = sadd.s32 %s835, %s836
          %s838 = smul.addr %s837, 128
          %s839 = scalar_lea.hbm %s2, %s838
          %s841 = sshll.u32 %s823, 4
          %s842 = int_to_ptr.vmem [resolvable:$true] %s841
          %844 = dma.vmem_to_hbm [thread:$0]  %s842, 256, %s839, %s820
        $region32: #{tpu_custom_call.1} parent=27 // pred_fallthru
          _
        // Predicated region
        $region33: #{tpu_custom_call.1} parent=27 // pred_check
          %p845 = pneg %p130
        $region34: #{tpu_custom_call.1} parent=27 // pred_check_branch
          %847 = sbr.rel (%p845) target = $region36
        $region35: #{tpu_custom_call.1} parent=27 // pred_region
          %s849 = ssub.s32 32, 32
          %850 = vsyncadd %s825, %s849
          %s851 = smul.addr %s26, 2
          %s852 = smul.addr %s25, 2
          %s853 = sadd.s32 %s851, %s852
          %s854 = smul.addr %s853, 16
          %s855 = scalar_lea.hbm %s3, %s854
          %s857 = sshll.u32 %s828, 4
          %s858 = int_to_ptr.vmem [resolvable:$true] %s857
          %860 = dma.vmem_to_hbm [thread:$0]  %s858, 32, %s855, %s825
        $region36: #{tpu_custom_call.1} parent=27 // pred_fallthru
          _
      $region28: #{tpu_custom_call.1} parent=5 // pred_fallthru
        _
      %p861 = scmp.le.s32.totalorder 2, %s16
      // Predicated region
      $region37: #{tpu_custom_call.1} parent=5 // pred_check
        %p862 = pneg %p861
      $region38: #{tpu_custom_call.1} parent=5 // pred_check_branch
        %864 = sbr.rel (%p862) target = $region40
      $region39: #{tpu_custom_call.1} parent=5 // pred_region
        %s865 = ssub.s32 %s16, 2
        // Predicated region
        $region41: #{tpu_custom_call.1} parent=39 // pred_check
          %p866 = pneg %p108
        $region42: #{tpu_custom_call.1} parent=39 // pred_check_branch
          %868 = sbr.rel (%p866) target = $region44
        $region43: #{tpu_custom_call.1} parent=39 // pred_region
          %s869 = sand.u32 %s93, 1
          %s870 = scalar_lea.sflag [#allocation3], %s869
          %s871 = sand.u32 %s93, 1
          %s872 = smul.addr %s871, 16
          %s873 = scalar_lea.vmem [#allocation2], %s872
          %874 = dma.done %s870, 256
        $region44: #{tpu_custom_call.1} parent=39 // pred_fallthru
          _
        // Predicated region
        $region45: #{tpu_custom_call.1} parent=39 // pred_check
          %p875 = pneg %p136
        $region46: #{tpu_custom_call.1} parent=39 // pred_check_branch
          %877 = sbr.rel (%p875) target = $region48
        $region47: #{tpu_custom_call.1} parent=39 // pred_region
          %s878 = sand.u32 %s121, 1
          %s879 = scalar_lea.sflag [#allocation5], %s878
          %s880 = sand.u32 %s121, 1
          %s881 = smul.addr %s880, 2
          %s882 = scalar_lea.vmem [#allocation4], %s881
          %883 = dma.done %s879, 32
        $region48: #{tpu_custom_call.1} parent=39 // pred_fallthru
          _
      $region40: #{tpu_custom_call.1} parent=5 // pred_fallthru
        _
    $region6: #{tpu_custom_call.1} parent=1 // loop_footer
      %s20 = sadd.s32 1, %s16
    $region7: #{tpu_custom_call.1} parent=1 // loop_footer_branch
      %15 = sbr.rel target = $region3
    $region8: #{tpu_custom_call.1} parent=1 // loop_exit
      _
    %884 = vsyncpa [#allocation3], 1
    %s885 = scalar_lea.sflag [#allocation3], 1
    %886 = vsyncpa %s885, 1
    %887 = vsyncpa [#allocation5], 1
    %s888 = scalar_lea.sflag [#allocation5], 1
    %889 = vsyncpa %s888, 1

</llo_original>
